<compile_context>
chip_gen: v7x
topology: tpu7x:2x2x1
jax: 0.10.0
libtpu: 0.0.40
codegen_flags: <defaults>
</compile_context>

<pallas_src>
import functools

import jax
import jax.numpy as jnp
from jax.experimental import pallas as pl
from jax.experimental.pallas import tpu as pltpu


def _ffn_kernel(x_ref, w13_ref, w2_ref, o_ref, acc_ref):
    # x_ref:   (tm, dim)        tile of tokens
    # w13_ref: (2, dim, tn)     stacked [w1^T ; w3^T] tile of the hidden axis
    # w2_ref:  (tn, dim)        tile of w2^T along the hidden axis
    # o_ref:   (tm, dim)        output tile (revisited across k)
    # acc_ref: (tm, dim) f32    VMEM accumulator
    k = pl.program_id(1)

    @pl.when(k == 0)
    def _():
        acc_ref[...] = jnp.zeros_like(acc_ref)

    x = x_ref[...]
    h1 = jnp.dot(x, w13_ref[0], preferred_element_type=jnp.float32)
    h3 = jnp.dot(x, w13_ref[1], preferred_element_type=jnp.float32)
    # exact SiLU in f32 on the (tm, tn) tile (sigmoid -> EUP slot, ~free)
    gated = (h1 * jax.nn.sigmoid(h1)) * h3
    acc_ref[...] += jnp.dot(gated.astype(w2_ref.dtype), w2_ref[...],
                            preferred_element_type=jnp.float32)

    @pl.when(k == pl.num_programs(1) - 1)
    def _():
        o_ref[...] = acc_ref[...].astype(o_ref.dtype)


def _round_up(x, m):
    return ((x + m - 1) // m) * m


def _pick_hidden_tile(hidden, dim, tm, in_bytes,
                      target=512, align=128, budget=48 << 20):
    """Largest multiple of `align` that divides `hidden`, is <= target, and
    keeps (double-buffered tiles + f32 accumulator) under the VMEM budget.
    Falls back to the full hidden dim (always a legal block) if hidden<align."""
    if hidden < align:
        return hidden
    t = max(align, (min(target, hidden) // align) * align)
    while t >= align:
        if hidden % t == 0:
            vmem = (2 * (tm * dim + 2 * dim * t + t * dim) * in_bytes
                    + tm * dim * 4)
            if vmem <= budget:
                return t
        t -= align
    return align if hidden % align == 0 else hidden


def prepare_weights(w1, w2, w3):
    """One-time weight prep (outside the per-call hot path).

    w1, w3: (hidden, dim)  -- PyTorch nn.Linear weight layout [out, in]
    w2:     (dim, hidden)
    Returns w13: (2, dim, hidden) = stack([w1.T, w3.T]), w2t: (hidden, dim).
    """
    return jnp.stack([w1.T, w3.T], axis=0), w2.T


@functools.partial(jax.jit, static_argnames=("tm_target", "tn_target"))
def feedforward_pallas(x, w13, w2t, *, tm_target=256, tn_target=512):
    """x: [batch, seq, dim]; w13: [2, dim, hidden]; w2t: [hidden, dim]."""
    batch, seq, dim = x.shape
    hidden = w13.shape[2]
    M = batch * seq
    bytes_per = jnp.dtype(x.dtype).itemsize

    # Token tile: at most tm_target, but no bigger than the (8-aligned) token
    # count, so tiny inputs don't pay for 256-row padding on the MXU.
    tm = min(tm_target, _round_up(M, 8))
    tn = _pick_hidden_tile(hidden, dim, tm, bytes_per, target=tn_target)

    m_blocks = pl.cdiv(M, tm)
    M_pad = m_blocks * tm

    x2d = x.reshape(M, dim)
    if M_pad != M:
        x2d = jnp.pad(x2d, ((0, M_pad - M), (0, 0)))

    # double-buffered pipelined tiles + f32 accumulator
    vmem_est = (2 * (tm * dim + 2 * dim * tn + tn * dim) * bytes_per
                + tm * dim * 4)
    vmem_limit = int(min(64 << 20, max(32 << 20, vmem_est * 3 // 2)))

    cost = pl.CostEstimate(
        flops=6 * M_pad * dim * hidden,
        transcendentals=M_pad * hidden,
        bytes_accessed=(2 * M_pad * dim + 3 * dim * hidden) * bytes_per,
    )

    out2d = pl.pallas_call(
        _ffn_kernel,
        out_shape=jax.ShapeDtypeStruct((M_pad, dim), x.dtype),
        grid_spec=pltpu.PrefetchScalarGridSpec(
            num_scalar_prefetch=0,
            grid=(m_blocks, hidden // tn),          # reduction axis last
            in_specs=[
                pl.BlockSpec((tm, dim), lambda i, k: (i, 0)),
                pl.BlockSpec((2, dim, tn), lambda i, k: (0, 0, k)),
                pl.BlockSpec((tn, dim), lambda i, k: (k, 0)),
            ],
            out_specs=pl.BlockSpec((tm, dim), lambda i, k: (i, 0)),
            scratch_shapes=[pltpu.VMEM((tm, dim), jnp.float32)],
        ),
        compiler_params=pltpu.CompilerParams(
            dimension_semantics=("parallel", "arbitrary"),
            vmem_limit_bytes=vmem_limit,
        ),
        cost_estimate=cost,
    )(x2d, w13, w2t)

    if M_pad != M:
        out2d = out2d[:M]
    return out2d.reshape(batch, seq, dim)


def _hidden_dim(dim, hidden_dim, multiple_of, ffn_dim_multiplier=None):
    hidden_dim = int(2 * hidden_dim / 3)
    if ffn_dim_multiplier is not None:
        hidden_dim = int(ffn_dim_multiplier * hidden_dim)
    return multiple_of * ((hidden_dim + multiple_of - 1) // multiple_of)


def _trunc_normal(key, shape, std):
    # matches nn.init.trunc_normal_(mean=0, std=std, a=-2, b=2)
    return jax.random.truncated_normal(key, -2.0, 2.0, shape, jnp.float32) * std


if __name__ == "__main__":
    # Small config mirroring FeedForward(dim=128, hidden_dim=256, multiple_of=128)
    dim = 128
    hidden = _hidden_dim(dim=dim, hidden_dim=256, multiple_of=128,
                         ffn_dim_multiplier=None)   # -> 256
    batch, seq = 2, 8

    key = jax.random.PRNGKey(0)
    kx, k1, k2, k3 = jax.random.split(key, 4)

    x = jax.random.normal(kx, (batch, seq, dim), dtype=jnp.float32)
    w1 = _trunc_normal(k1, (hidden, dim), 0.02)   # nn.Linear(dim, hidden).weight
    w2 = _trunc_normal(k2, (dim, hidden), 0.02)   # nn.Linear(hidden, dim).weight
    w3 = _trunc_normal(k3, (hidden, dim), 0.02)   # nn.Linear(dim, hidden).weight

    # One-time weight prep (hoisted out of the per-forward hot path).
    w13, w2t = prepare_weights(w1, w2, w3)
    w13, w2t = jax.block_until_ready((w13, w2t))

    # ---- f32 run (exact-ish check against plain-JAX reference) ----
    out = feedforward_pallas(x, w13, w2t)
    jax.block_until_ready(out)

    h1_ref = x @ w1.T
    ref = (jax.nn.silu(h1_ref) * (x @ w3.T)) @ w2.T
    assert out.shape == (batch, seq, dim)
    assert jnp.allclose(out, ref, atol=1e-5, rtol=1e-5)

    # ---- bf16 run (recommended production dtype on v6e/v7x MXU) ----
    out_bf16 = feedforward_pallas(
        x.astype(jnp.bfloat16), w13.astype(jnp.bfloat16),
        w2t.astype(jnp.bfloat16))
    jax.block_until_ready(out_bf16)
    assert jnp.allclose(out_bf16.astype(jnp.float32), ref,
                        atol=1e-2, rtol=1e-1)

    print("KERNEL_OK")
</pallas_src>

<mosaic_0001>
module attributes {stable_mosaic.version = 11 : i64} {
  func.func @_ffn_kernel(%arg0: i32, %arg1: i32, %arg2: memref<16x128xf32, #tpu.memory_space<vmem>>, %arg3: memref<2x128x256xf32, #tpu.memory_space<vmem>>, %arg4: memref<256x128xf32, #tpu.memory_space<vmem>>, %arg5: memref<16x128xf32, #tpu.memory_space<vmem>>, %arg6: memref<16x128xf32, #tpu.memory_space<vmem>>) attributes {dimension_semantics = [#tpu.dimension_semantics<parallel>, #tpu.dimension_semantics<arbitrary>], iteration_bounds = array<i64: 1, 1>, scalar_prefetch = 0 : i64, scratch_operands = 1 : i64, tpu.core_type = #tpu.core_type<tc>, window_params = [{transform_indices = @transform_0, window_bounds = array<i64: 16, 128>}, {transform_indices = @transform_1, window_bounds = array<i64: 2, 128, 256>}, {transform_indices = @transform_2, window_bounds = array<i64: 256, 128>}, {transform_indices = @transform_3, window_bounds = array<i64: 16, 128>}]} {
    %c0_i32 = arith.constant 0 : i32
    %0 = arith.cmpi eq, %arg1, %c0_i32 : i32
    %1 = arith.extui %0 : i1 to i32
    %c0_i32_0 = arith.constant 0 : i32
    %2 = arith.cmpi ne, %1, %c0_i32_0 : i32
    scf.if %2 {
      %cst_18 = arith.constant 0.000000e+00 : f32
      %25 = vector.broadcast %cst_18 : f32 to vector<16x128xf32>
      %c0_19 = arith.constant 0 : index
      %c0_20 = arith.constant 0 : index
      %26 = vector.load %arg6[%c0_19, %c0_20] : memref<16x128xf32, #tpu.memory_space<vmem>>, vector<16x128xf32>
      tpu.vector_store %arg6[%c0_19, %c0_20], %25 {strides = array<i32>} : memref<16x128xf32, #tpu.memory_space<vmem>>, vector<16x128xf32>,
    } else {
    }
    %c0 = arith.constant 0 : index
    %c0_1 = arith.constant 0 : index
    %3 = vector.load %arg2[%c0, %c0_1] : memref<16x128xf32, #tpu.memory_space<vmem>>, vector<16x128xf32>
    %c0_2 = arith.constant 0 : index
    %c0_3 = arith.constant 0 : index
    %c0_4 = arith.constant 0 : index
    %4 = vector.load %arg3[%c0_2, %c0_3, %c0_4] : memref<2x128x256xf32, #tpu.memory_space<vmem>>, vector<1x128x256xf32>
    %5 = vector.shape_cast %4 : vector<1x128x256xf32> to vector<128x256xf32>
    %cst = arith.constant dense<0.000000e+00> : vector<16x256xf32>
    %6 = tpu.matmul %3, %5, %cst {dimension_numbers = #tpu.dot_dimension_numbers<[1], [0], [0], [1], [0, 0, 1, 1], [], []>} : vector<16x128xf32>, vector<128x256xf32>, vector<16x256xf32> -> vector<16x256xf32>
    %c1 = arith.constant 1 : index
    %c0_5 = arith.constant 0 : index
    %c0_6 = arith.constant 0 : index
    %7 = vector.load %arg3[%c1, %c0_5, %c0_6] : memref<2x128x256xf32, #tpu.memory_space<vmem>>, vector<1x128x256xf32>
    %8 = vector.shape_cast %7 : vector<1x128x256xf32> to vector<128x256xf32>
    %cst_7 = arith.constant dense<0.000000e+00> : vector<16x256xf32>
    %9 = tpu.matmul %3, %8, %cst_7 {dimension_numbers = #tpu.dot_dimension_numbers<[1], [0], [0], [1], [0, 0, 1, 1], [], []>} : vector<16x128xf32>, vector<128x256xf32>, vector<16x256xf32> -> vector<16x256xf32>
    %10 = arith.negf %6 : vector<16x256xf32>
    %11 = math.exp %10 : vector<16x256xf32>
    %cst_8 = arith.constant 1.000000e+00 : f32
    %12 = vector.broadcast %cst_8 : f32 to vector<16x256xf32>
    %13 = arith.addf %12, %11 : vector<16x256xf32>
    %14 = arith.divf %12, %13 : vector<16x256xf32>
    %15 = arith.mulf %6, %14 : vector<16x256xf32>
    %16 = arith.mulf %15, %9 : vector<16x256xf32>
    %c0_9 = arith.constant 0 : index
    %c0_10 = arith.constant 0 : index
    %17 = vector.load %arg6[%c0_9, %c0_10] : memref<16x128xf32, #tpu.memory_space<vmem>>, vector<16x128xf32>
    %c0_11 = arith.constant 0 : index
    %c0_12 = arith.constant 0 : index
    %18 = vector.load %arg4[%c0_11, %c0_12] : memref<256x128xf32, #tpu.memory_space<vmem>>, vector<256x128xf32>
    %cst_13 = arith.constant dense<0.000000e+00> : vector<16x128xf32>
    %19 = tpu.matmul %16, %18, %cst_13 {dimension_numbers = #tpu.dot_dimension_numbers<[1], [0], [0], [1], [0, 0, 1, 1], [], []>} : vector<16x256xf32>, vector<256x128xf32>, vector<16x128xf32> -> vector<16x128xf32>
    %20 = arith.addf %17, %19 : vector<16x128xf32>
    %c0_14 = arith.constant 0 : index
    %c0_15 = arith.constant 0 : index
    %21 = vector.load %arg6[%c0_14, %c0_15] : memref<16x128xf32, #tpu.memory_space<vmem>>, vector<16x128xf32>
    tpu.vector_store %arg6[%c0_14, %c0_15], %20 {strides = array<i32>} : memref<16x128xf32, #tpu.memory_space<vmem>>, vector<16x128xf32>,
    %c0_i32_16 = arith.constant 0 : i32
    %22 = arith.cmpi eq, %arg1, %c0_i32_16 : i32
    %23 = arith.extui %22 : i1 to i32
    %c0_i32_17 = arith.constant 0 : i32
    %24 = arith.cmpi ne, %23, %c0_i32_17 : i32
    scf.if %24 {
      %c0_18 = arith.constant 0 : index
      %c0_19 = arith.constant 0 : index
      %25 = vector.load %arg6[%c0_18, %c0_19] : memref<16x128xf32, #tpu.memory_space<vmem>>, vector<16x128xf32>
      %c0_20 = arith.constant 0 : index
      %c0_21 = arith.constant 0 : index
      %26 = vector.load %arg5[%c0_20, %c0_21] : memref<16x128xf32, #tpu.memory_space<vmem>>, vector<16x128xf32>
      tpu.vector_store %arg5[%c0_20, %c0_21], %25 {strides = array<i32>} : memref<16x128xf32, #tpu.memory_space<vmem>>, vector<16x128xf32>,
    } else {
    }
    return
  }
  func.func @transform_0(%arg0: i32, %arg1: i32) -> (i32, i32) {
    %c0_i32 = arith.constant 0 : i32
    %c0_i32_0 = arith.constant 0 : i32
    return %arg0, %c0_i32 : i32, i32
  }
  func.func @transform_1(%arg0: i32, %arg1: i32) -> (i32, i32, i32) {
    %c0_i32 = arith.constant 0 : i32
    %c0_i32_0 = arith.constant 0 : i32
    %c0_i32_1 = arith.constant 0 : i32
    return %c0_i32, %c0_i32_0, %arg1 : i32, i32, i32
  }
  func.func @transform_2(%arg0: i32, %arg1: i32) -> (i32, i32) {
    %c0_i32 = arith.constant 0 : i32
    %c0_i32_0 = arith.constant 0 : i32
    return %arg1, %c0_i32 : i32, i32
  }
  func.func @transform_3(%arg0: i32, %arg1: i32) -> (i32, i32) {
    %c0_i32 = arith.constant 0 : i32
    %c0_i32_0 = arith.constant 0 : i32
    return %arg0, %c0_i32 : i32, i32
  }
}

</mosaic_0001>

<llo_original>
// kernel: feedforward_pallas.1
$region0: #{feedforward_pallas.1}
  #allocation0 [shape = 'u32[]', space=smem, size = 0x4, offset = 0x4, fixed_abs, tag = 'smem constant byte address 0x4 - core index']
  #allocation1 [shape = 'u32[144,128]{1,0:T(1,128)}', space=vmem, size = 0x12000, scoped, tag = 'internal scratch']
  #allocation2 [shape = 'f32[16,128]{1,0:T(8,128)}', space=vmem, size = 0x2000, scoped, tag = 'scratch operand']
  %s0 = inlined_call_operand.hbm [shape: f32[16,128], index: 0, kind: input, shape index: {}]
  %s1 = inlined_call_operand.hbm [shape: f32[2,128,256], index: 1, kind: input, shape index: {}]
  %s2 = inlined_call_operand.hbm [shape: f32[256,128], index: 2, kind: input, shape index: {}]
  %s3 = inlined_call_operand.hbm [shape: f32[16,128], index: 3, kind: output, shape index: {}]
  %s4 = sld [smem:[#allocation0]]
  $region42: #{feedforward_pallas.1} parent=0
    _
  %s6 = ssub.s32 1, %s4
  %s7 = scalar_select 0, %s6, %s4
  $region1: #{feedforward_pallas.1} parent=0
    #allocation3 [shape = 'u8[8192]{0}', space=vmem, size = 0x2000, scoped, tag = 'input window, operand 0, single buffered']
    #allocation4 [shape = 's32[1]{0}', space=sflag, size = 0x4, scoped, tag = 'scoped memory for feedforward_pallas.1']
    #allocation5 [shape = 's32[1]{0}', space=sflag, size = 0x4, scoped, tag = 'scoped memory for feedforward_pallas.1']
    #allocation6 [shape = 'u8[262144]{0}', space=vmem, size = 0x40000, scoped, tag = 'input window, operand 1, single buffered']
    #allocation7 [shape = 's32[1]{0}', space=sflag, size = 0x4, scoped, tag = 'scoped memory for feedforward_pallas.1']
    #allocation8 [shape = 'u8[131072]{0}', space=vmem, size = 0x20000, scoped, tag = 'input window, operand 2, single buffered']
    #allocation9 [shape = 'u8[8192]{0}', space=vmem, size = 0x2000, scoped, tag = 'output window, operand 0, single buffered']
    %8 = vsyncpa [#allocation4], 0
    %9 = vsyncpa [#allocation7], 0
    %10 = vsyncpa [#allocation5], 0
    // Predicated region
    $region2: #{feedforward_pallas.1} parent=1 // pred_check
      _
    $region3: #{feedforward_pallas.1} parent=1 // pred_check_branch
      %12 = sbr.rel (0) target = $region5
    $region4: #{feedforward_pallas.1} parent=1 // pred_region
      %s14 = ssub.s32 256, 256
      %15 = vsyncadd [#allocation4], %s14
      %s16 = sshll.u32 [#allocation3], 4
      %s17 = int_to_ptr.vmem [resolvable:$true] %s16
      %22 = dma.hbm_to_vmem [thread:$0]  %s0, 256, %s17, [#allocation4], 128, 128, 8
    $region5: #{feedforward_pallas.1} parent=1 // pred_fallthru
      _
    // Predicated region
    $region6: #{feedforward_pallas.1} parent=1 // pred_check
      _
    $region7: #{feedforward_pallas.1} parent=1 // pred_check_branch
      %24 = sbr.rel (0) target = $region9
    $region8: #{feedforward_pallas.1} parent=1 // pred_region
      %s26 = ssub.s32 8192, 8192
      %27 = vsyncadd [#allocation7], %s26
      %s28 = sshll.u32 [#allocation6], 4
      %s29 = int_to_ptr.vmem [resolvable:$true] %s28
      %34 = dma.hbm_to_vmem [thread:$0]  %s1, 8192, %s29, [#allocation7], 256, 256, 16
    $region9: #{feedforward_pallas.1} parent=1 // pred_fallthru
      _
    // Predicated region
    $region10: #{feedforward_pallas.1} parent=1 // pred_check
      _
    $region11: #{feedforward_pallas.1} parent=1 // pred_check_branch
      %36 = sbr.rel (0) target = $region13
    $region12: #{feedforward_pallas.1} parent=1 // pred_region
      %s38 = ssub.s32 4096, 4096
      %39 = vsyncadd [#allocation7], %s38
      %s40 = sshll.u32 [#allocation8], 4
      %s41 = int_to_ptr.vmem [resolvable:$true] %s40
      %46 = dma.hbm_to_vmem [thread:$0]  %s2, 4096, %s41, [#allocation7], 128, 128, 8
    $region13: #{feedforward_pallas.1} parent=1 // pred_fallthru
      _
    // Predicated region
    $region14: #{feedforward_pallas.1} parent=1 // pred_check
      _
    $region15: #{feedforward_pallas.1} parent=1 // pred_check_branch
      %48 = sbr.rel (0) target = $region17
    $region16: #{feedforward_pallas.1} parent=1 // pred_region
      %49 = dma.done [#allocation4], 256
    $region17: #{feedforward_pallas.1} parent=1 // pred_fallthru
      _
    // Predicated region
    $region18: #{feedforward_pallas.1} parent=1 // pred_check
      _
    $region19: #{feedforward_pallas.1} parent=1 // pred_check_branch
      %51 = sbr.rel (0) target = $region21
    $region20: #{feedforward_pallas.1} parent=1 // pred_region
      %52 = dma.done [#allocation7], 8192
    $region21: #{feedforward_pallas.1} parent=1 // pred_fallthru
      _
    // Predicated region
    $region22: #{feedforward_pallas.1} parent=1 // pred_check
      _
    $region23: #{feedforward_pallas.1} parent=1 // pred_check_branch
      %54 = sbr.rel (0) target = $region25
    $region24: #{feedforward_pallas.1} parent=1 // pred_region
      %55 = dma.done [#allocation7], 4096
    $region25: #{feedforward_pallas.1} parent=1 // pred_fallthru
      _
    %p56 = scmp.eq.s32.totalorder 0, 0
    // Predicated region
    $region26: #{feedforward_pallas.1} parent=1 // pred_check
      %p57 = pneg %p56
    $region27: #{feedforward_pallas.1} parent=1 // pred_check_branch
      %59 = sbr.rel (%p57) target = $region29
    $region28: #{feedforward_pallas.1} parent=1 // pred_region
      %60 = vst [vmem:[#allocation2] sm:$0xff] 0.0
      %61 = vst [vmem:[#allocation2 + $0x8] sm:$0xff] 0.0
    $region29: #{feedforward_pallas.1} parent=1 // pred_fallthru
      _
    %v62 = vld [vmem:[#allocation3] sm:$0xff]
    %v63 = vld [vmem:[#allocation3 + $0x8] sm:$0xff]
    %v64 = vld [vmem:[#allocation6] sm:$0xff]
    %v65 = vld [vmem:[#allocation6 + $0x8] sm:$0xff]
    %v66 = vld [vmem:[#allocation6 + $0x10] sm:$0xff]
    %v67 = vld [vmem:[#allocation6 + $0x18] sm:$0xff]
    %v68 = vld [vmem:[#allocation6 + $0x20] sm:$0xff]
    %v69 = vld [vmem:[#allocation6 + $0x28] sm:$0xff]
    %v70 = vld [vmem:[#allocation6 + $0x30] sm:$0xff]
    %v71 = vld [vmem:[#allocation6 + $0x38] sm:$0xff]
    %v72 = vld [vmem:[#allocation6 + $0x40] sm:$0xff]
    %v73 = vld [vmem:[#allocation6 + $0x48] sm:$0xff]
    %v74 = vld [vmem:[#allocation6 + $0x50] sm:$0xff]
    %v75 = vld [vmem:[#allocation6 + $0x58] sm:$0xff]
    %v76 = vld [vmem:[#allocation6 + $0x60] sm:$0xff]
    %v77 = vld [vmem:[#allocation6 + $0x68] sm:$0xff]
    %v78 = vld [vmem:[#allocation6 + $0x70] sm:$0xff]
    %v79 = vld [vmem:[#allocation6 + $0x78] sm:$0xff]
    %v80 = vld [vmem:[#allocation6 + $0x80] sm:$0xff]
    %v81 = vld [vmem:[#allocation6 + $0x88] sm:$0xff]
    %v82 = vld [vmem:[#allocation6 + $0x90] sm:$0xff]
    %v83 = vld [vmem:[#allocation6 + $0x98] sm:$0xff]
    %v84 = vld [vmem:[#allocation6 + $0xa0] sm:$0xff]
    %v85 = vld [vmem:[#allocation6 + $0xa8] sm:$0xff]
    %v86 = vld [vmem:[#allocation6 + $0xb0] sm:$0xff]
    %v87 = vld [vmem:[#allocation6 + $0xb8] sm:$0xff]
    %v88 = vld [vmem:[#allocation6 + $0xc0] sm:$0xff]
    %v89 = vld [vmem:[#allocation6 + $0xc8] sm:$0xff]
    %v90 = vld [vmem:[#allocation6 + $0xd0] sm:$0xff]
    %v91 = vld [vmem:[#allocation6 + $0xd8] sm:$0xff]
    %v92 = vld [vmem:[#allocation6 + $0xe0] sm:$0xff]
    %v93 = vld [vmem:[#allocation6 + $0xe8] sm:$0xff]
    %v94 = vld [vmem:[#allocation6 + $0xf0] sm:$0xff]
    %v95 = vld [vmem:[#allocation6 + $0xf8] sm:$0xff]
    %96 = vmatprep.subr.mxu0 %v65
    %97 = vmatpush1.msra.mxu0 %v64
    %98 = vmatprep.subr.mxu0 %v67
    %99 = vmatpush1.msra.mxu0 %v66
    %100 = vmatprep.subr.mxu0 %v69
    %101 = vmatpush1.msra.mxu0 %v68
    %102 = vmatprep.subr.mxu0 %v71
    %103 = vmatpush1.msra.mxu0 %v70
    %104 = vmatprep.subr.mxu0 %v73
    %105 = vmatpush1.msra.mxu0 %v72
    %106 = vmatprep.subr.mxu0 %v75
    %107 = vmatpush1.msra.mxu0 %v74
    %108 = vmatprep.subr.mxu0 %v77
    %109 = vmatpush1.msra.mxu0 %v76
    %110 = vmatprep.subr.mxu0 %v79
    %111 = vmatpush1.msra.mxu0 %v78
    %112 = vmatprep.subr.mxu0 %v81
    %113 = vmatpush1.msra.mxu0 %v80
    %114 = vmatprep.subr.mxu0 %v83
    %115 = vmatpush1.msra.mxu0 %v82
    %116 = vmatprep.subr.mxu0 %v85
    %117 = vmatpush1.msra.mxu0 %v84
    %118 = vmatprep.subr.mxu0 %v87
    %119 = vmatpush1.msra.mxu0 %v86
    %120 = vmatprep.subr.mxu0 %v89
    %121 = vmatpush1.msra.mxu0 %v88
    %122 = vmatprep.subr.mxu0 %v91
    %123 = vmatpush1.msra.mxu0 %v90
    %124 = vmatprep.subr.mxu0 %v93
    %125 = vmatpush1.msra.mxu0 %v92
    %126 = vmatprep.subr.mxu0 %v95
    %127 = vmatpush1.msra.mxu0 %v94
    %128 = vmatprep.subr.mxu0 0.0
    %129 = vmatpush1.msra.mxu0 0.0
    %130 = vmatprep.subr.mxu0 0.0
    %131 = vmatpush1.msra.mxu0 0.0
    %132 = vmatprep.subr.mxu0 0.0
    %133 = vmatpush1.msra.mxu0 0.0
    %134 = vmatprep.subr.mxu0 0.0
    %135 = vmatpush1.msra.mxu0 0.0
    %136 = vmatprep.subr.mxu0 0.0
    %137 = vmatpush1.msra.mxu0 0.0
    %138 = vmatprep.subr.mxu0 0.0
    %139 = vmatpush1.msra.mxu0 0.0
    %140 = vmatprep.subr.mxu0 0.0
    %141 = vmatpush1.msra.mxu0 0.0
    %142 = vmatprep.subr.mxu0 0.0
    %143 = vmatpush1.msra.mxu0 0.0
    %144 = vmatprep.subr.mxu0 0.0
    %145 = vmatpush1.msra.mxu0 0.0
    %146 = vmatprep.subr.mxu0 0.0
    %147 = vmatpush1.msra.mxu0 0.0
    %148 = vmatprep.subr.mxu0 0.0
    %149 = vmatpush1.msra.mxu0 0.0
    %150 = vmatprep.subr.mxu0 0.0
    %151 = vmatpush1.msra.mxu0 0.0
    %152 = vmatprep.subr.mxu0 0.0
    %153 = vmatpush1.msra.mxu0 0.0
    %154 = vmatprep.subr.mxu0 0.0
    %155 = vmatpush1.msra.mxu0 0.0
    %156 = vmatprep.subr.mxu0 0.0
    %157 = vmatpush1.msra.mxu0 0.0
    %158 = vmatprep.subr.mxu0 0.0
    %159 = vmatpush1.msra.mxu0 0.0
    %160 = vmatprep.mubr.f32.mxu0 0.0
    %161 = vmatmul.mubr.f32.gmra.mrb[0].mxu0 %v62
    %v162 = vpop.f32.mrb[0].mxu0
    %v163 = vadd.f32 0.0, %v162
    %v164 = vpop.f32.mrb[0].mxu0
    %v165 = vadd.f32 0.0, %v164
    %166 = vmatprep.mubr.f32.mxu0 0.0
    %167 = vmatmul.mubr.f32.gmra.mrb[0].mxu0 %v63
    %v168 = vpop.f32.mrb[0].mxu0
    %v169 = vadd.f32 0.0, %v168
    %v170 = vpop.f32.mrb[0].mxu0
    %v171 = vadd.f32 0.0, %v170
    %172 = vdwg.mxu0
    %s173 = scalar_lea.vmem [#allocation6], 256
    %v174 = vld [vmem:[%s173] sm:$0xff]
    %v175 = vld [vmem:[%s173 + $0x8] sm:$0xff]
    %v176 = vld [vmem:[%s173 + $0x10] sm:$0xff]
    %v177 = vld [vmem:[%s173 + $0x18] sm:$0xff]
    %v178 = vld [vmem:[%s173 + $0x20] sm:$0xff]
    %v179 = vld [vmem:[%s173 + $0x28] sm:$0xff]
    %v180 = vld [vmem:[%s173 + $0x30] sm:$0xff]
    %v181 = vld [vmem:[%s173 + $0x38] sm:$0xff]
    %v182 = vld [vmem:[%s173 + $0x40] sm:$0xff]
    %v183 = vld [vmem:[%s173 + $0x48] sm:$0xff]
    %v184 = vld [vmem:[%s173 + $0x50] sm:$0xff]
    %v185 = vld [vmem:[%s173 + $0x58] sm:$0xff]
    %v186 = vld [vmem:[%s173 + $0x60] sm:$0xff]
    %v187 = vld [vmem:[%s173 + $0x68] sm:$0xff]
    %v188 = vld [vmem:[%s173 + $0x70] sm:$0xff]
    %v189 = vld [vmem:[%s173 + $0x78] sm:$0xff]
    %v190 = vld [vmem:[%s173 + $0x80] sm:$0xff]
    %v191 = vld [vmem:[%s173 + $0x88] sm:$0xff]
    %v192 = vld [vmem:[%s173 + $0x90] sm:$0xff]
    %v193 = vld [vmem:[%s173 + $0x98] sm:$0xff]
    %v194 = vld [vmem:[%s173 + $0xa0] sm:$0xff]
    %v195 = vld [vmem:[%s173 + $0xa8] sm:$0xff]
    %v196 = vld [vmem:[%s173 + $0xb0] sm:$0xff]
    %v197 = vld [vmem:[%s173 + $0xb8] sm:$0xff]
    %v198 = vld [vmem:[%s173 + $0xc0] sm:$0xff]
    %v199 = vld [vmem:[%s173 + $0xc8] sm:$0xff]
    %v200 = vld [vmem:[%s173 + $0xd0] sm:$0xff]
    %v201 = vld [vmem:[%s173 + $0xd8] sm:$0xff]
    %v202 = vld [vmem:[%s173 + $0xe0] sm:$0xff]
    %v203 = vld [vmem:[%s173 + $0xe8] sm:$0xff]
    %v204 = vld [vmem:[%s173 + $0xf0] sm:$0xff]
    %v205 = vld [vmem:[%s173 + $0xf8] sm:$0xff]
    %206 = vmatprep.subr.mxu0 %v175
    %207 = vmatpush1.msra.mxu0 %v174
    %208 = vmatprep.subr.mxu0 %v177
    %209 = vmatpush1.msra.mxu0 %v176
    %210 = vmatprep.subr.mxu0 %v179
    %211 = vmatpush1.msra.mxu0 %v178
    %212 = vmatprep.subr.mxu0 %v181
    %213 = vmatpush1.msra.mxu0 %v180
    %214 = vmatprep.subr.mxu0 %v183
    %215 = vmatpush1.msra.mxu0 %v182
    %216 = vmatprep.subr.mxu0 %v185
    %217 = vmatpush1.msra.mxu0 %v184
    %218 = vmatprep.subr.mxu0 %v187
    %219 = vmatpush1.msra.mxu0 %v186
    %220 = vmatprep.subr.mxu0 %v189
    %221 = vmatpush1.msra.mxu0 %v188
    %222 = vmatprep.subr.mxu0 %v191
    %223 = vmatpush1.msra.mxu0 %v190
    %224 = vmatprep.subr.mxu0 %v193
    %225 = vmatpush1.msra.mxu0 %v192
    %226 = vmatprep.subr.mxu0 %v195
    %227 = vmatpush1.msra.mxu0 %v194
    %228 = vmatprep.subr.mxu0 %v197
    %229 = vmatpush1.msra.mxu0 %v196
    %230 = vmatprep.subr.mxu0 %v199
    %231 = vmatpush1.msra.mxu0 %v198
    %232 = vmatprep.subr.mxu0 %v201
    %233 = vmatpush1.msra.mxu0 %v200
    %234 = vmatprep.subr.mxu0 %v203
    %235 = vmatpush1.msra.mxu0 %v202
    %236 = vmatprep.subr.mxu0 %v205
    %237 = vmatpush1.msra.mxu0 %v204
    %238 = vmatprep.subr.mxu0 0.0
    %239 = vmatpush1.msra.mxu0 0.0
    %240 = vmatprep.subr.mxu0 0.0
    %241 = vmatpush1.msra.mxu0 0.0
    %242 = vmatprep.subr.mxu0 0.0
    %243 = vmatpush1.msra.mxu0 0.0
    %244 = vmatprep.subr.mxu0 0.0
    %245 = vmatpush1.msra.mxu0 0.0
    %246 = vmatprep.subr.mxu0 0.0
    %247 = vmatpush1.msra.mxu0 0.0
    %248 = vmatprep.subr.mxu0 0.0
    %249 = vmatpush1.msra.mxu0 0.0
    %250 = vmatprep.subr.mxu0 0.0
    %251 = vmatpush1.msra.mxu0 0.0
    %252 = vmatprep.subr.mxu0 0.0
    %253 = vmatpush1.msra.mxu0 0.0
    %254 = vmatprep.subr.mxu0 0.0
    %255 = vmatpush1.msra.mxu0 0.0
    %256 = vmatprep.subr.mxu0 0.0
    %257 = vmatpush1.msra.mxu0 0.0
    %258 = vmatprep.subr.mxu0 0.0
    %259 = vmatpush1.msra.mxu0 0.0
    %260 = vmatprep.subr.mxu0 0.0
    %261 = vmatpush1.msra.mxu0 0.0
    %262 = vmatprep.subr.mxu0 0.0
    %263 = vmatpush1.msra.mxu0 0.0
    %264 = vmatprep.subr.mxu0 0.0
    %265 = vmatpush1.msra.mxu0 0.0
    %266 = vmatprep.subr.mxu0 0.0
    %267 = vmatpush1.msra.mxu0 0.0
    %268 = vmatprep.subr.mxu0 0.0
    %269 = vmatpush1.msra.mxu0 0.0
    %270 = vmatprep.mubr.f32.mxu0 0.0
    %271 = vmatmul.mubr.f32.gmra.mrb[0].mxu0 %v62
    %v272 = vpop.f32.mrb[0].mxu0
    %v273 = vadd.f32 0.0, %v272
    %v274 = vpop.f32.mrb[0].mxu0
    %v275 = vadd.f32 0.0, %v274
    %276 = vmatprep.mubr.f32.mxu0 0.0
    %277 = vmatmul.mubr.f32.gmra.mrb[0].mxu0 %v63
    %v278 = vpop.f32.mrb[0].mxu0
    %v279 = vadd.f32 0.0, %v278
    %v280 = vpop.f32.mrb[0].mxu0
    %v281 = vadd.f32 0.0, %v280
    %282 = vdwg.mxu0
    %v283 = vxor.u32 %v163, 2147483648
    %v284 = vxor.u32 %v165, 2147483648
    %v285 = vxor.u32 %v169, 2147483648
    %v286 = vxor.u32 %v171, 2147483648
    %v287 = vmul.f32 %v283, 1.442695
    %v288 = vpow.pop %v287
    %v289 = vmul.f32 %v284, 1.442695
    %v290 = vpow.pop %v289
    %v291 = vmul.f32 %v285, 1.442695
    %v292 = vpow.pop %v291
    %v293 = vmul.f32 %v286, 1.442695
    %v294 = vpow.pop %v293
    %v295 = vadd.f32 %v288, 1.0
    %v296 = vadd.f32 %v290, 1.0
    %v297 = vadd.f32 %v292, 1.0
    %v298 = vadd.f32 %v294, 1.0
    %v299 = vrcp.pop %v295
    %v300 = vmul.f32 1.0, %v299
    %v301 = vrcp.pop %v296
    %v302 = vmul.f32 1.0, %v301
    %v303 = vrcp.pop %v297
    %v304 = vmul.f32 1.0, %v303
    %v305 = vrcp.pop %v298
    %v306 = vmul.f32 1.0, %v305
    %v307 = vmul.f32 %v163, %v300
    %v308 = vmul.f32 %v165, %v302
    %v309 = vmul.f32 %v169, %v304
    %v310 = vmul.f32 %v171, %v306
    %v311 = vmul.f32 %v307, %v273
    %v312 = vmul.f32 %v308, %v275
    %v313 = vmul.f32 %v309, %v279
    %v314 = vmul.f32 %v310, %v281
    %v315 = vld [vmem:[#allocation2] sm:$0xff]
    %v316 = vld [vmem:[#allocation2 + $0x8] sm:$0xff]
    %v317 = vld [vmem:[#allocation8] sm:$0xff]
    %v318 = vld [vmem:[#allocation8 + $0x8] sm:$0xff]
    %v319 = vld [vmem:[#allocation8 + $0x10] sm:$0xff]
    %v320 = vld [vmem:[#allocation8 + $0x18] sm:$0xff]
    %v321 = vld [vmem:[#allocation8 + $0x20] sm:$0xff]
    %v322 = vld [vmem:[#allocation8 + $0x28] sm:$0xff]
    %v323 = vld [vmem:[#allocation8 + $0x30] sm:$0xff]
    %v324 = vld [vmem:[#allocation8 + $0x38] sm:$0xff]
    %v325 = vld [vmem:[#allocation8 + $0x40] sm:$0xff]
    %v326 = vld [vmem:[#allocation8 + $0x48] sm:$0xff]
    %v327 = vld [vmem:[#allocation8 + $0x50] sm:$0xff]
    %v328 = vld [vmem:[#allocation8 + $0x58] sm:$0xff]
    %v329 = vld [vmem:[#allocation8 + $0x60] sm:$0xff]
    %v330 = vld [vmem:[#allocation8 + $0x68] sm:$0xff]
    %v331 = vld [vmem:[#allocation8 + $0x70] sm:$0xff]
    %v332 = vld [vmem:[#allocation8 + $0x78] sm:$0xff]
    %v333 = vld [vmem:[#allocation8 + $0x80] sm:$0xff]
    %v334 = vld [vmem:[#allocation8 + $0x88] sm:$0xff]
    %v335 = vld [vmem:[#allocation8 + $0x90] sm:$0xff]
    %v336 = vld [vmem:[#allocation8 + $0x98] sm:$0xff]
    %v337 = vld [vmem:[#allocation8 + $0xa0] sm:$0xff]
    %v338 = vld [vmem:[#allocation8 + $0xa8] sm:$0xff]
    %v339 = vld [vmem:[#allocation8 + $0xb0] sm:$0xff]
    %v340 = vld [vmem:[#allocation8 + $0xb8] sm:$0xff]
    %v341 = vld [vmem:[#allocation8 + $0xc0] sm:$0xff]
    %v342 = vld [vmem:[#allocation8 + $0xc8] sm:$0xff]
    %v343 = vld [vmem:[#allocation8 + $0xd0] sm:$0xff]
    %v344 = vld [vmem:[#allocation8 + $0xd8] sm:$0xff]
    %v345 = vld [vmem:[#allocation8 + $0xe0] sm:$0xff]
    %v346 = vld [vmem:[#allocation8 + $0xe8] sm:$0xff]
    %v347 = vld [vmem:[#allocation8 + $0xf0] sm:$0xff]
    %v348 = vld [vmem:[#allocation8 + $0xf8] sm:$0xff]
    %349 = vmatprep.subr.mxu0 0.0
    %350 = vmatpush1.msra.mxu0 %v317
    %351 = vmatprep.subr.mxu0 0.0
    %352 = vmatpush1.msra.mxu0 %v318
    %353 = vmatprep.subr.mxu0 0.0
    %354 = vmatpush1.msra.mxu0 %v319
    %355 = vmatprep.subr.mxu0 0.0
    %356 = vmatpush1.msra.mxu0 %v320
    %357 = vmatprep.subr.mxu0 0.0
    %358 = vmatpush1.msra.mxu0 %v321
    %359 = vmatprep.subr.mxu0 0.0
    %360 = vmatpush1.msra.mxu0 %v322
    %361 = vmatprep.subr.mxu0 0.0
    %362 = vmatpush1.msra.mxu0 %v323
    %363 = vmatprep.subr.mxu0 0.0
    %364 = vmatpush1.msra.mxu0 %v324
    %365 = vmatprep.subr.mxu0 0.0
    %366 = vmatpush1.msra.mxu0 %v325
    %367 = vmatprep.subr.mxu0 0.0
    %368 = vmatpush1.msra.mxu0 %v326
    %369 = vmatprep.subr.mxu0 0.0
    %370 = vmatpush1.msra.mxu0 %v327
    %371 = vmatprep.subr.mxu0 0.0
    %372 = vmatpush1.msra.mxu0 %v328
    %373 = vmatprep.subr.mxu0 0.0
    %374 = vmatpush1.msra.mxu0 %v329
    %375 = vmatprep.subr.mxu0 0.0
    %376 = vmatpush1.msra.mxu0 %v330
    %377 = vmatprep.subr.mxu0 0.0
    %378 = vmatpush1.msra.mxu0 %v331
    %379 = vmatprep.subr.mxu0 0.0
    %380 = vmatpush1.msra.mxu0 %v332
    %381 = vmatprep.subr.mxu0 0.0
    %382 = vmatpush1.msra.mxu0 %v333
    %383 = vmatprep.subr.mxu0 0.0
    %384 = vmatpush1.msra.mxu0 %v334
    %385 = vmatprep.subr.mxu0 0.0
    %386 = vmatpush1.msra.mxu0 %v335
    %387 = vmatprep.subr.mxu0 0.0
    %388 = vmatpush1.msra.mxu0 %v336
    %389 = vmatprep.subr.mxu0 0.0
    %390 = vmatpush1.msra.mxu0 %v337
    %391 = vmatprep.subr.mxu0 0.0
    %392 = vmatpush1.msra.mxu0 %v338
    %393 = vmatprep.subr.mxu0 0.0
    %394 = vmatpush1.msra.mxu0 %v339
    %395 = vmatprep.subr.mxu0 0.0
    %396 = vmatpush1.msra.mxu0 %v340
    %397 = vmatprep.subr.mxu0 0.0
    %398 = vmatpush1.msra.mxu0 %v341
    %399 = vmatprep.subr.mxu0 0.0
    %400 = vmatpush1.msra.mxu0 %v342
    %401 = vmatprep.subr.mxu0 0.0
    %402 = vmatpush1.msra.mxu0 %v343
    %403 = vmatprep.subr.mxu0 0.0
    %404 = vmatpush1.msra.mxu0 %v344
    %405 = vmatprep.subr.mxu0 0.0
    %406 = vmatpush1.msra.mxu0 %v345
    %407 = vmatprep.subr.mxu0 0.0
    %408 = vmatpush1.msra.mxu0 %v346
    %409 = vmatprep.subr.mxu0 0.0
    %410 = vmatpush1.msra.mxu0 %v347
    %411 = vmatprep.subr.mxu0 0.0
    %412 = vmatpush1.msra.mxu0 %v348
    %413 = vmatprep.mubr.f32.mxu0 %v312
    %414 = vmatmul.mubr.f32.gmra.mrb[0].mxu0 %v311
    %v415 = vpop.f32.mrb[0].mxu0
    %v416 = vadd.f32 0.0, %v415
    %v417 = vpop.f32.mrb[0].mxu0
    %418 = vmatprep.mubr.f32.mxu0 %v314
    %419 = vmatmul.mubr.f32.gmra.mrb[0].mxu0 %v313
    %v420 = vpop.f32.mrb[0].mxu0
    %v421 = vadd.f32 0.0, %v420
    %v422 = vpop.f32.mrb[0].mxu0
    %423 = vdwg.mxu0
    %v424 = vadd.f32 %v315, %v416
    %v425 = vadd.f32 %v316, %v421
    %426 = vst [vmem:[#allocation2] sm:$0xff] %v424
    %427 = vst [vmem:[#allocation2 + $0x8] sm:$0xff] %v425
    // Predicated region
    $region30: #{feedforward_pallas.1} parent=1 // pred_check
      %p428 = pneg %p56
    $region31: #{feedforward_pallas.1} parent=1 // pred_check_branch
      %430 = sbr.rel (%p428) target = $region33
    $region32: #{feedforward_pallas.1} parent=1 // pred_region
      %v431 = vld [vmem:[#allocation2] sm:$0xff]
      %v432 = vld [vmem:[#allocation2 + $0x8] sm:$0xff]
      %433 = vst [vmem:[#allocation9] sm:$0xff] %v431
      %434 = vst [vmem:[#allocation9 + $0x8] sm:$0xff] %v432
    $region33: #{feedforward_pallas.1} parent=1 // pred_fallthru
      _
    // Predicated region
    $region34: #{feedforward_pallas.1} parent=1 // pred_check
      _
    $region35: #{feedforward_pallas.1} parent=1 // pred_check_branch
      %436 = sbr.rel (0) target = $region37
    $region36: #{feedforward_pallas.1} parent=1 // pred_region
      %s438 = ssub.s32 256, 256
      %439 = vsyncadd [#allocation5], %s438
      %s440 = sshll.u32 [#allocation9], 4
      %s441 = int_to_ptr.vmem [resolvable:$true] %s440
      %446 = dma.vmem_to_hbm [thread:$0]  %s441, 256, %s3, [#allocation5], 128, 128, 8
    $region37: #{feedforward_pallas.1} parent=1 // pred_fallthru
      _
    // Predicated region
    $region38: #{feedforward_pallas.1} parent=1 // pred_check
      _
    $region39: #{feedforward_pallas.1} parent=1 // pred_check_branch
      %448 = sbr.rel (0) target = $region41
    $region40: #{feedforward_pallas.1} parent=1 // pred_region
      %449 = dma.done [#allocation5], 256
    $region41: #{feedforward_pallas.1} parent=1 // pred_fallthru
      _
    %450 = vsyncpa [#allocation4], 1
    %451 = vsyncpa [#allocation7], 1
    %452 = vsyncpa [#allocation5], 1

</llo_original>
